<compile_context>
chip_gen: v6e
topology: v6e:2x2x1
jax: 0.10.0
libtpu: 0.0.40
codegen_flags: <defaults>
</compile_context>

<pallas_src>
import jax
import jax.numpy as jnp
from jax.experimental import pallas as pl
from jax.experimental.pallas import tpu as pltpu


TB_MAX = 1024  # max batch rows per grid step (bf16 x tile ~1.6 MiB)


def mlp_kernel(x_ref, w1_ref, b1_ref, w2_ref, b2_ref,
               w3_ref, b3_ref, w4_ref, b4_ref, o_ref):
    x = x_ref[...]                                    # (TB, 784) bf16

    # fc1 + ReLU : the dominant matmul (M=TB, K=784, N=28), f32 accumulation.
    h = jnp.dot(x, w1_ref[...], preferred_element_type=jnp.float32) + b1_ref[...]
    h = jnp.maximum(h, 0.0).astype(jnp.bfloat16)

    # fc2 / fc3 + ReLU : tiny 28x28 layers, kept fused as cheap filler.
    h = jnp.dot(h, w2_ref[...], preferred_element_type=jnp.float32) + b2_ref[...]
    h = jnp.maximum(h, 0.0).astype(jnp.bfloat16)

    h = jnp.dot(h, w3_ref[...], preferred_element_type=jnp.float32) + b3_ref[...]
    h = jnp.maximum(h, 0.0).astype(jnp.bfloat16)

    # fc4 + numerically stable log_softmax over the last axis.
    logits = jnp.dot(h, w4_ref[...], preferred_element_type=jnp.float32) + b4_ref[...]
    m = jnp.max(logits, axis=-1, keepdims=True)
    shifted = logits - m
    lse = jnp.log(jnp.sum(jnp.exp(shifted), axis=-1, keepdims=True))
    o_ref[...] = shifted - lse


def net_forward(x, params):
    """x: (B, 1, 28, 28) or (B, 784). Returns (B, 10) f32 log-probs."""
    x = x.reshape(-1, 28 * 28)
    B = x.shape[0]
    (w1, b1), (w2, b2), (w3, b3), (w4, b4) = params

    # bf16 streaming input + bf16 weights; biases stay f32 (added post-accum).
    x = x.astype(jnp.bfloat16)
    w1, w2, w3, w4 = (w.astype(jnp.bfloat16) for w in (w1, w2, w3, w4))
    b1, b2, b3, b4 = (b.astype(jnp.float32) for b in (b1, b2, b3, b4))

    # Choose batch tile TB (multiple of 8, <= TB_MAX) and pad B up to a
    # multiple of TB.  Zero-pad rows are computed then sliced off (log_softmax
    # of an all-equal row is finite, so no NaN risk).
    Bp = max(8, pl.cdiv(B, 8) * 8)
    if Bp > TB_MAX:
        TB = TB_MAX
        Bp = pl.cdiv(Bp, TB) * TB
    else:
        TB = Bp
    if Bp != B:
        x = jnp.pad(x, ((0, Bp - B), (0, 0)))

    grid = (Bp // TB,)

    def tiled(shape):
        return pl.BlockSpec(shape, lambda i: (i, 0))

    def resident(arr):
        return pl.BlockSpec(arr.shape, lambda i: (0, 0))

    out = pl.pallas_call(
        mlp_kernel,
        out_shape=jax.ShapeDtypeStruct((Bp, 10), jnp.float32),
        grid=grid,
        in_specs=[
            tiled((TB, 28 * 28)),
            resident(w1), resident(b1),
            resident(w2), resident(b2),
            resident(w3), resident(b3),
            resident(w4), resident(b4),
        ],
        out_specs=tiled((TB, 10)),
        compiler_params=pltpu.CompilerParams(
            dimension_semantics=("parallel",),
        ),
    )(x, w1, b1, w2, b2, w3, b3, w4, b4)

    return out[:B]


def init_params(key):
    """nn.Linear-style U(-1/sqrt(fan_in), +1/sqrt(fan_in)) init.
    Weights stored as (in, out) [transpose of PyTorch's (out, in)];
    biases as (1, out) for a 2D VMEM layout."""
    dims = [(28 * 28, 28), (28, 28), (28, 28), (28, 10)]
    params = []
    for (fan_in, fan_out) in dims:
        key, kw, kb = jax.random.split(key, 3)
        bound = 1.0 / jnp.sqrt(fan_in)
        w = jax.random.uniform(kw, (fan_in, fan_out), jnp.float32, -bound, bound)
        b = jax.random.uniform(kb, (1, fan_out), jnp.float32, -bound, bound)
        params.append((w, b))
    return params


def reference_forward(x, params):
    """Plain-JAX f32 reference for sanity checking."""
    x = x.reshape(-1, 28 * 28).astype(jnp.float32)
    (w1, b1), (w2, b2), (w3, b3), (w4, b4) = params
    h = jnp.maximum(x @ w1 + b1, 0.0)
    h = jnp.maximum(h @ w2 + b2, 0.0)
    h = jnp.maximum(h @ w3 + b3, 0.0)
    logits = h @ w4 + b4
    return jax.nn.log_softmax(logits, axis=1)


if __name__ == "__main__":
    key = jax.random.PRNGKey(0)
    key, kx1, kx2 = jax.random.split(key, 3)
    params = init_params(key)

    # Small MNIST-shaped batch (NCHW), single grid step.
    x_small = jax.random.normal(kx1, (8, 1, 28, 28), dtype=jnp.float32)
    out_small = jax.block_until_ready(net_forward(x_small, params))
    ref_small = reference_forward(x_small, params)
    assert out_small.shape == (8, 10), out_small.shape
    assert jnp.allclose(out_small, ref_small, atol=3e-2, rtol=1e-2), \
        "mismatch vs reference (small batch)"

    # Larger batch exercising multiple grid steps + tail padding (1300 -> 2 tiles).
    x_big = jax.random.normal(kx2, (1300, 1, 28, 28), dtype=jnp.float32)
    out_big = jax.block_until_ready(net_forward(x_big, params))
    ref_big = reference_forward(x_big, params)
    assert out_big.shape == (1300, 10), out_big.shape
    assert jnp.allclose(out_big, ref_big, atol=3e-2, rtol=1e-2), \
        "mismatch vs reference (tiled batch)"

    print("KERNEL_OK")
</pallas_src>

<mosaic_0001>
module attributes {stable_mosaic.version = 11 : i64} {
  func.func @mlp_kernel(%arg0: i32, %arg1: memref<8x784xbf16, #tpu.memory_space<vmem>>, %arg2: memref<784x28xbf16, #tpu.memory_space<vmem>>, %arg3: memref<1x28xf32, #tpu.memory_space<vmem>>, %arg4: memref<28x28xbf16, #tpu.memory_space<vmem>>, %arg5: memref<1x28xf32, #tpu.memory_space<vmem>>, %arg6: memref<28x28xbf16, #tpu.memory_space<vmem>>, %arg7: memref<1x28xf32, #tpu.memory_space<vmem>>, %arg8: memref<28x10xbf16, #tpu.memory_space<vmem>>, %arg9: memref<1x10xf32, #tpu.memory_space<vmem>>, %arg10: memref<8x10xf32, #tpu.memory_space<vmem>>) attributes {dimension_semantics = [#tpu.dimension_semantics<parallel>], iteration_bounds = array<i64: 1>, scalar_prefetch = 0 : i64, scratch_operands = 0 : i64, tpu.core_type = #tpu.core_type<tc>, window_params = [{transform_indices = @transform_0, window_bounds = array<i64: 8, 784>}, {pipeline_mode = #tpu.pipeline_mode<synchronous>, transform_indices = @transform_1, window_bounds = array<i64: 784, 28>}, {pipeline_mode = #tpu.pipeline_mode<synchronous>, transform_indices = @transform_2, window_bounds = array<i64: 1, 28>}, {pipeline_mode = #tpu.pipeline_mode<synchronous>, transform_indices = @transform_3, window_bounds = array<i64: 28, 28>}, {pipeline_mode = #tpu.pipeline_mode<synchronous>, transform_indices = @transform_4, window_bounds = array<i64: 1, 28>}, {pipeline_mode = #tpu.pipeline_mode<synchronous>, transform_indices = @transform_5, window_bounds = array<i64: 28, 28>}, {pipeline_mode = #tpu.pipeline_mode<synchronous>, transform_indices = @transform_6, window_bounds = array<i64: 1, 28>}, {pipeline_mode = #tpu.pipeline_mode<synchronous>, transform_indices = @transform_7, window_bounds = array<i64: 28, 10>}, {pipeline_mode = #tpu.pipeline_mode<synchronous>, transform_indices = @transform_8, window_bounds = array<i64: 1, 10>}, {transform_indices = @transform_9, window_bounds = array<i64: 8, 10>}]} {
    %c0 = arith.constant 0 : index
    %c0_0 = arith.constant 0 : index
    %0 = vector.load %arg1[%c0, %c0_0] : memref<8x784xbf16, #tpu.memory_space<vmem>>, vector<8x784xbf16>
    %c0_1 = arith.constant 0 : index
    %c0_2 = arith.constant 0 : index
    %1 = vector.load %arg2[%c0_1, %c0_2] : memref<784x28xbf16, #tpu.memory_space<vmem>>, vector<784x28xbf16>
    %cst = arith.constant dense<0.000000e+00> : vector<8x28xf32>
    %2 = tpu.matmul %0, %1, %cst {dimension_numbers = #tpu.dot_dimension_numbers<[1], [0], [0], [1], [0, 0, 1, 1], [], []>} : vector<8x784xbf16>, vector<784x28xbf16>, vector<8x28xf32> -> vector<8x28xf32>
    %c0_3 = arith.constant 0 : index
    %c0_4 = arith.constant 0 : index
    %3 = vector.load %arg3[%c0_3, %c0_4] : memref<1x28xf32, #tpu.memory_space<vmem>>, vector<1x28xf32>
    %4 = vector.broadcast %3 : vector<1x28xf32> to vector<8x28xf32>
    %5 = arith.addf %2, %4 : vector<8x28xf32>
    %cst_5 = arith.constant 0.000000e+00 : f32
    %6 = vector.broadcast %cst_5 : f32 to vector<8x28xf32>
    %7 = arith.maximumf %5, %6 : vector<8x28xf32>
    %8 = arith.truncf %7 : vector<8x28xf32> to vector<8x28xbf16>
    %c0_6 = arith.constant 0 : index
    %c0_7 = arith.constant 0 : index
    %9 = vector.load %arg4[%c0_6, %c0_7] : memref<28x28xbf16, #tpu.memory_space<vmem>>, vector<28x28xbf16>
    %cst_8 = arith.constant dense<0.000000e+00> : vector<8x28xf32>
    %10 = tpu.matmul %8, %9, %cst_8 {dimension_numbers = #tpu.dot_dimension_numbers<[1], [0], [0], [1], [0, 0, 1, 1], [], []>} : vector<8x28xbf16>, vector<28x28xbf16>, vector<8x28xf32> -> vector<8x28xf32>
    %c0_9 = arith.constant 0 : index
    %c0_10 = arith.constant 0 : index
    %11 = vector.load %arg5[%c0_9, %c0_10] : memref<1x28xf32, #tpu.memory_space<vmem>>, vector<1x28xf32>
    %12 = vector.broadcast %11 : vector<1x28xf32> to vector<8x28xf32>
    %13 = arith.addf %10, %12 : vector<8x28xf32>
    %cst_11 = arith.constant 0.000000e+00 : f32
    %14 = vector.broadcast %cst_11 : f32 to vector<8x28xf32>
    %15 = arith.maximumf %13, %14 : vector<8x28xf32>
    %16 = arith.truncf %15 : vector<8x28xf32> to vector<8x28xbf16>
    %c0_12 = arith.constant 0 : index
    %c0_13 = arith.constant 0 : index
    %17 = vector.load %arg6[%c0_12, %c0_13] : memref<28x28xbf16, #tpu.memory_space<vmem>>, vector<28x28xbf16>
    %cst_14 = arith.constant dense<0.000000e+00> : vector<8x28xf32>
    %18 = tpu.matmul %16, %17, %cst_14 {dimension_numbers = #tpu.dot_dimension_numbers<[1], [0], [0], [1], [0, 0, 1, 1], [], []>} : vector<8x28xbf16>, vector<28x28xbf16>, vector<8x28xf32> -> vector<8x28xf32>
    %c0_15 = arith.constant 0 : index
    %c0_16 = arith.constant 0 : index
    %19 = vector.load %arg7[%c0_15, %c0_16] : memref<1x28xf32, #tpu.memory_space<vmem>>, vector<1x28xf32>
    %20 = vector.broadcast %19 : vector<1x28xf32> to vector<8x28xf32>
    %21 = arith.addf %18, %20 : vector<8x28xf32>
    %cst_17 = arith.constant 0.000000e+00 : f32
    %22 = vector.broadcast %cst_17 : f32 to vector<8x28xf32>
    %23 = arith.maximumf %21, %22 : vector<8x28xf32>
    %24 = arith.truncf %23 : vector<8x28xf32> to vector<8x28xbf16>
    %c0_18 = arith.constant 0 : index
    %c0_19 = arith.constant 0 : index
    %25 = vector.load %arg8[%c0_18, %c0_19] : memref<28x10xbf16, #tpu.memory_space<vmem>>, vector<28x10xbf16>
    %cst_20 = arith.constant dense<0.000000e+00> : vector<8x10xf32>
    %26 = tpu.matmul %24, %25, %cst_20 {dimension_numbers = #tpu.dot_dimension_numbers<[1], [0], [0], [1], [0, 0, 1, 1], [], []>} : vector<8x28xbf16>, vector<28x10xbf16>, vector<8x10xf32> -> vector<8x10xf32>
    %c0_21 = arith.constant 0 : index
    %c0_22 = arith.constant 0 : index
    %27 = vector.load %arg9[%c0_21, %c0_22] : memref<1x10xf32, #tpu.memory_space<vmem>>, vector<1x10xf32>
    %28 = vector.broadcast %27 : vector<1x10xf32> to vector<8x10xf32>
    %29 = arith.addf %26, %28 : vector<8x10xf32>
    %cst_23 = arith.constant dense<0xFF800000> : vector<8xf32>
    %30 = vector.multi_reduction <maximumf>, %29, %cst_23 [1] : vector<8x10xf32> to vector<8xf32>
    %31 = vector.shape_cast %30 : vector<8xf32> to vector<8x1xf32>
    %32 = vector.broadcast %31 : vector<8x1xf32> to vector<8x10xf32>
    %33 = arith.subf %29, %32 : vector<8x10xf32>
    %34 = math.exp %33 : vector<8x10xf32>
    %cst_24 = arith.constant dense<0.000000e+00> : vector<8xf32>
    %35 = vector.multi_reduction <add>, %34, %cst_24 [1] : vector<8x10xf32> to vector<8xf32>
    %36 = vector.shape_cast %35 : vector<8xf32> to vector<8x1xf32>
    %37 = math.log %36 : vector<8x1xf32>
    %38 = vector.broadcast %37 : vector<8x1xf32> to vector<8x10xf32>
    %39 = arith.subf %33, %38 : vector<8x10xf32>
    %c0_25 = arith.constant 0 : index
    %c0_26 = arith.constant 0 : index
    %40 = vector.load %arg10[%c0_25, %c0_26] : memref<8x10xf32, #tpu.memory_space<vmem>>, vector<8x10xf32>
    tpu.vector_store %arg10[%c0_25, %c0_26], %39 {strides = array<i32>} : memref<8x10xf32, #tpu.memory_space<vmem>>, vector<8x10xf32>,
    return
  }
  func.func @transform_0(%arg0: i32) -> (i32, i32) {
    %c0_i32 = arith.constant 0 : i32
    %c0_i32_0 = arith.constant 0 : i32
    return %arg0, %c0_i32 : i32, i32
  }
  func.func @transform_1(%arg0: i32) -> (i32, i32) {
    %c0_i32 = arith.constant 0 : i32
    %c0_i32_0 = arith.constant 0 : i32
    %c0_i32_1 = arith.constant 0 : i32
    return %c0_i32, %c0_i32_0 : i32, i32
  }
  func.func @transform_2(%arg0: i32) -> (i32, i32) {
    %c0_i32 = arith.constant 0 : i32
    %c0_i32_0 = arith.constant 0 : i32
    %c0_i32_1 = arith.constant 0 : i32
    return %c0_i32, %c0_i32_0 : i32, i32
  }
  func.func @transform_3(%arg0: i32) -> (i32, i32) {
    %c0_i32 = arith.constant 0 : i32
    %c0_i32_0 = arith.constant 0 : i32
    %c0_i32_1 = arith.constant 0 : i32
    return %c0_i32, %c0_i32_0 : i32, i32
  }
  func.func @transform_4(%arg0: i32) -> (i32, i32) {
    %c0_i32 = arith.constant 0 : i32
    %c0_i32_0 = arith.constant 0 : i32
    %c0_i32_1 = arith.constant 0 : i32
    return %c0_i32, %c0_i32_0 : i32, i32
  }
  func.func @transform_5(%arg0: i32) -> (i32, i32) {
    %c0_i32 = arith.constant 0 : i32
    %c0_i32_0 = arith.constant 0 : i32
    %c0_i32_1 = arith.constant 0 : i32
    return %c0_i32, %c0_i32_0 : i32, i32
  }
  func.func @transform_6(%arg0: i32) -> (i32, i32) {
    %c0_i32 = arith.constant 0 : i32
    %c0_i32_0 = arith.constant 0 : i32
    %c0_i32_1 = arith.constant 0 : i32
    return %c0_i32, %c0_i32_0 : i32, i32
  }
  func.func @transform_7(%arg0: i32) -> (i32, i32) {
    %c0_i32 = arith.constant 0 : i32
    %c0_i32_0 = arith.constant 0 : i32
    %c0_i32_1 = arith.constant 0 : i32
    return %c0_i32, %c0_i32_0 : i32, i32
  }
  func.func @transform_8(%arg0: i32) -> (i32, i32) {
    %c0_i32 = arith.constant 0 : i32
    %c0_i32_0 = arith.constant 0 : i32
    %c0_i32_1 = arith.constant 0 : i32
    return %c0_i32, %c0_i32_0 : i32, i32
  }
  func.func @transform_9(%arg0: i32) -> (i32, i32) {
    %c0_i32 = arith.constant 0 : i32
    %c0_i32_0 = arith.constant 0 : i32
    return %arg0, %c0_i32 : i32, i32
  }
}

</mosaic_0001>

<llo_original>
// kernel: tpu_custom_call.1
$region0: #{tpu_custom_call.1}
  #allocation0 [shape = 'u32[]', space=smem, size = 0x4, offset = 0x4, fixed_abs, tag = 'smem constant byte address 0x4 - core index']
  #allocation1 [shape = 'u32[144,128]{1,0:T(1,128)}', space=vmem, size = 0x12000, scoped, tag = 'internal scratch']
  %s0 = inlined_call_operand.vmem [shape: bf16[8,784], index: 0, kind: input, shape index: {}]
  %s1 = inlined_call_operand.vmem [shape: bf16[784,28], index: 1, kind: input, shape index: {}]
  %s2 = inlined_call_operand.vmem [shape: f32[1,28], index: 2, kind: input, shape index: {}]
  %s3 = inlined_call_operand.vmem [shape: bf16[28,28], index: 3, kind: input, shape index: {}]
  %s4 = inlined_call_operand.vmem [shape: f32[1,28], index: 4, kind: input, shape index: {}]
  %s5 = inlined_call_operand.vmem [shape: bf16[28,28], index: 5, kind: input, shape index: {}]
  %s6 = inlined_call_operand.vmem [shape: f32[1,28], index: 6, kind: input, shape index: {}]
  %s7 = inlined_call_operand.vmem [shape: bf16[28,10], index: 7, kind: input, shape index: {}]
  %s8 = inlined_call_operand.vmem [shape: f32[1,10], index: 8, kind: input, shape index: {}]
  %s9 = inlined_call_operand.hbm [shape: f32[8,10], index: 9, kind: output, shape index: {}]
  %s10 = sld [smem:[#allocation0]]
  $region46: #{tpu_custom_call.1} parent=0
    _
  %s12 = ssub.s32 1, %s10
  %s13 = scalar_select 0, %s12, %s10
  $region1: #{tpu_custom_call.1} parent=0
    #allocation2 [shape = 'u8[4096]{0}', space=vmem, size = 0x1000, scoped, tag = 'output window, operand 0, single buffered']
    #allocation3 [shape = 's32[1]{0}', space=sflag, size = 0x4, scoped, tag = 'scoped memory for tpu_custom_call.1']
    %14 = vsyncpa [#allocation3], 0
    // Predicated region
    $region2: #{tpu_custom_call.1} parent=1 // pred_check
      _
    $region3: #{tpu_custom_call.1} parent=1 // pred_check_branch
      %16 = sbr.rel (0) target = $region5
    $region4: #{tpu_custom_call.1} parent=1 // pred_region
      _
    $region5: #{tpu_custom_call.1} parent=1 // pred_fallthru
      _
    // Predicated region
    $region6: #{tpu_custom_call.1} parent=1 // pred_check
      _
    $region7: #{tpu_custom_call.1} parent=1 // pred_check_branch
      %18 = sbr.rel (0) target = $region9
    $region8: #{tpu_custom_call.1} parent=1 // pred_region
      _
    $region9: #{tpu_custom_call.1} parent=1 // pred_fallthru
      _
    // Predicated region
    $region10: #{tpu_custom_call.1} parent=1 // pred_check
      _
    $region11: #{tpu_custom_call.1} parent=1 // pred_check_branch
      %20 = sbr.rel (0) target = $region13
    $region12: #{tpu_custom_call.1} parent=1 // pred_region
      _
    $region13: #{tpu_custom_call.1} parent=1 // pred_fallthru
      _
    // Predicated region
    $region14: #{tpu_custom_call.1} parent=1 // pred_check
      _
    $region15: #{tpu_custom_call.1} parent=1 // pred_check_branch
      %22 = sbr.rel (0) target = $region17
    $region16: #{tpu_custom_call.1} parent=1 // pred_region
      _
    $region17: #{tpu_custom_call.1} parent=1 // pred_fallthru
      _
    // Predicated region
    $region18: #{tpu_custom_call.1} parent=1 // pred_check
      _
    $region19: #{tpu_custom_call.1} parent=1 // pred_check_branch
      %24 = sbr.rel (0) target = $region21
    $region20: #{tpu_custom_call.1} parent=1 // pred_region
      _
    $region21: #{tpu_custom_call.1} parent=1 // pred_fallthru
      _
    // Predicated region
    $region22: #{tpu_custom_call.1} parent=1 // pred_check
      _
    $region23: #{tpu_custom_call.1} parent=1 // pred_check_branch
      %26 = sbr.rel (0) target = $region25
    $region24: #{tpu_custom_call.1} parent=1 // pred_region
      _
    $region25: #{tpu_custom_call.1} parent=1 // pred_fallthru
      _
    // Predicated region
    $region26: #{tpu_custom_call.1} parent=1 // pred_check
      _
    $region27: #{tpu_custom_call.1} parent=1 // pred_check_branch
      %28 = sbr.rel (0) target = $region29
    $region28: #{tpu_custom_call.1} parent=1 // pred_region
      _
    $region29: #{tpu_custom_call.1} parent=1 // pred_fallthru
      _
    // Predicated region
    $region30: #{tpu_custom_call.1} parent=1 // pred_check
      _
    $region31: #{tpu_custom_call.1} parent=1 // pred_check_branch
      %30 = sbr.rel (0) target = $region33
    $region32: #{tpu_custom_call.1} parent=1 // pred_region
      _
    $region33: #{tpu_custom_call.1} parent=1 // pred_fallthru
      _
    // Predicated region
    $region34: #{tpu_custom_call.1} parent=1 // pred_check
      _
    $region35: #{tpu_custom_call.1} parent=1 // pred_check_branch
      %32 = sbr.rel (0) target = $region37
    $region36: #{tpu_custom_call.1} parent=1 // pred_region
      _
    $region37: #{tpu_custom_call.1} parent=1 // pred_fallthru
      _
    %v34 = vld [vmem:[%s0] sm:$0xff]
    %v35 = vld [vmem:[%s0 + $0x8] sm:$0xff]
    %v36 = vld [vmem:[%s0 + $0x10] sm:$0xff]
    %v37 = vld [vmem:[%s0 + $0x18] sm:$0xf]
    %v38 = vld [vmem:[%s1] sm:$0xf]
    %v39 = vld [vmem:[%s1 + $0x4] sm:$0xf]
    %v40 = vld [vmem:[%s1 + $0x8] sm:$0xf]
    %v41 = vld [vmem:[%s1 + $0xc] sm:$0xf]
    %v42 = vld [vmem:[%s1 + $0x10] sm:$0xf]
    %v43 = vld [vmem:[%s1 + $0x14] sm:$0xf]
    %v44 = vld [vmem:[%s1 + $0x18] sm:$0xf]
    %v45 = vld [vmem:[%s1 + $0x1c] sm:$0xf]
    %v46 = vld [vmem:[%s1 + $0x20] sm:$0xf]
    %v47 = vld [vmem:[%s1 + $0x24] sm:$0xf]
    %v48 = vld [vmem:[%s1 + $0x28] sm:$0xf]
    %v49 = vld [vmem:[%s1 + $0x2c] sm:$0xf]
    %v50 = vld [vmem:[%s1 + $0x30] sm:$0xf]
    %v51 = vld [vmem:[%s1 + $0x34] sm:$0xf]
    %v52 = vld [vmem:[%s1 + $0x38] sm:$0xf]
    %v53 = vld [vmem:[%s1 + $0x3c] sm:$0xf]
    %v54 = vld [vmem:[%s1 + $0x40] sm:$0xf]
    %v55 = vld [vmem:[%s1 + $0x44] sm:$0xf]
    %v56 = vld [vmem:[%s1 + $0x48] sm:$0xf]
    %v57 = vld [vmem:[%s1 + $0x4c] sm:$0xf]
    %v58 = vld [vmem:[%s1 + $0x50] sm:$0xf]
    %v59 = vld [vmem:[%s1 + $0x54] sm:$0xf]
    %v60 = vld [vmem:[%s1 + $0x58] sm:$0xf]
    %v61 = vld [vmem:[%s1 + $0x5c] sm:$0xf]
    %v62 = vld [vmem:[%s1 + $0x60] sm:$0xf]
    %v63 = vld [vmem:[%s1 + $0x64] sm:$0xf]
    %v64 = vld [vmem:[%s1 + $0x68] sm:$0xf]
    %v65 = vld [vmem:[%s1 + $0x6c] sm:$0xf]
    %v66 = vld [vmem:[%s1 + $0x70] sm:$0xf]
    %v67 = vld [vmem:[%s1 + $0x74] sm:$0xf]
    %v68 = vld [vmem:[%s1 + $0x78] sm:$0xf]
    %v69 = vld [vmem:[%s1 + $0x7c] sm:$0xf]
    %v70 = vld [vmem:[%s1 + $0x80] sm:$0xf]
    %v71 = vld [vmem:[%s1 + $0x84] sm:$0xf]
    %v72 = vld [vmem:[%s1 + $0x88] sm:$0xf]
    %v73 = vld [vmem:[%s1 + $0x8c] sm:$0xf]
    %v74 = vld [vmem:[%s1 + $0x90] sm:$0xf]
    %v75 = vld [vmem:[%s1 + $0x94] sm:$0xf]
    %v76 = vld [vmem:[%s1 + $0x98] sm:$0xf]
    %v77 = vld [vmem:[%s1 + $0x9c] sm:$0xf]
    %v78 = vld [vmem:[%s1 + $0xa0] sm:$0xf]
    %v79 = vld [vmem:[%s1 + $0xa4] sm:$0xf]
    %v80 = vld [vmem:[%s1 + $0xa8] sm:$0xf]
    %v81 = vld [vmem:[%s1 + $0xac] sm:$0xf]
    %v82 = vld [vmem:[%s1 + $0xb0] sm:$0xf]
    %v83 = vld [vmem:[%s1 + $0xb4] sm:$0xf]
    %v84 = vld [vmem:[%s1 + $0xb8] sm:$0xf]
    %v85 = vld [vmem:[%s1 + $0xbc] sm:$0xf]
    %v86 = vld [vmem:[%s1 + $0xc0] sm:$0xf]
    %v87 = vld [vmem:[%s1 + $0xc4] sm:$0xf]
    %v88 = vld [vmem:[%s1 + $0xc8] sm:$0xf]
    %v89 = vld [vmem:[%s1 + $0xcc] sm:$0xf]
    %v90 = vld [vmem:[%s1 + $0xd0] sm:$0xf]
    %v91 = vld [vmem:[%s1 + $0xd4] sm:$0xf]
    %v92 = vld [vmem:[%s1 + $0xd8] sm:$0xf]
    %v93 = vld [vmem:[%s1 + $0xdc] sm:$0xf]
    %v94 = vld [vmem:[%s1 + $0xe0] sm:$0xf]
    %v95 = vld [vmem:[%s1 + $0xe4] sm:$0xf]
    %v96 = vld [vmem:[%s1 + $0xe8] sm:$0xf]
    %v97 = vld [vmem:[%s1 + $0xec] sm:$0xf]
    %v98 = vld [vmem:[%s1 + $0xf0] sm:$0xf]
    %v99 = vld [vmem:[%s1 + $0xf4] sm:$0xf]
    %v100 = vld [vmem:[%s1 + $0xf8] sm:$0xf]
    %v101 = vld [vmem:[%s1 + $0xfc] sm:$0xf]
    %v102 = vld [vmem:[%s1 + $0x100] sm:$0xf]
    %v103 = vld [vmem:[%s1 + $0x104] sm:$0xf]
    %v104 = vld [vmem:[%s1 + $0x108] sm:$0xf]
    %v105 = vld [vmem:[%s1 + $0x10c] sm:$0xf]
    %v106 = vld [vmem:[%s1 + $0x110] sm:$0xf]
    %v107 = vld [vmem:[%s1 + $0x114] sm:$0xf]
    %v108 = vld [vmem:[%s1 + $0x118] sm:$0xf]
    %v109 = vld [vmem:[%s1 + $0x11c] sm:$0xf]
    %v110 = vld [vmem:[%s1 + $0x120] sm:$0xf]
    %v111 = vld [vmem:[%s1 + $0x124] sm:$0xf]
    %v112 = vld [vmem:[%s1 + $0x128] sm:$0xf]
    %v113 = vld [vmem:[%s1 + $0x12c] sm:$0xf]
    %v114 = vld [vmem:[%s1 + $0x130] sm:$0xf]
    %v115 = vld [vmem:[%s1 + $0x134] sm:$0xf]
    %v116 = vld [vmem:[%s1 + $0x138] sm:$0xf]
    %v117 = vld [vmem:[%s1 + $0x13c] sm:$0xf]
    %v118 = vld [vmem:[%s1 + $0x140] sm:$0xf]
    %v119 = vld [vmem:[%s1 + $0x144] sm:$0xf]
    %v120 = vld [vmem:[%s1 + $0x148] sm:$0xf]
    %v121 = vld [vmem:[%s1 + $0x14c] sm:$0xf]
    %v122 = vld [vmem:[%s1 + $0x150] sm:$0xf]
    %v123 = vld [vmem:[%s1 + $0x154] sm:$0xf]
    %v124 = vld [vmem:[%s1 + $0x158] sm:$0xf]
    %v125 = vld [vmem:[%s1 + $0x15c] sm:$0xf]
    %v126 = vld [vmem:[%s1 + $0x160] sm:$0xf]
    %v127 = vld [vmem:[%s1 + $0x164] sm:$0xf]
    %v128 = vld [vmem:[%s1 + $0x168] sm:$0xf]
    %v129 = vld [vmem:[%s1 + $0x16c] sm:$0xf]
    %v130 = vld [vmem:[%s1 + $0x170] sm:$0xf]
    %v131 = vld [vmem:[%s1 + $0x174] sm:$0xf]
    %v132 = vld [vmem:[%s1 + $0x178] sm:$0xf]
    %v133 = vld [vmem:[%s1 + $0x17c] sm:$0xf]
    %v134 = vld [vmem:[%s1 + $0x180] sm:$0xf]
    %v135 = vld [vmem:[%s1 + $0x184] sm:$0xf]
    %v136 = vld [vmem:[%s2] sm:$0x1]
    %v138 = vlaneseq
    %v139 = vshrl.u32 %v138, 7
    %v140 = vsub.s32 0, %v139
    %v141 = vrot.slane %v136, %v140
    %v147 = vunpack.c.l.b16 %v34
    %v148 = vunpack.c.h.b16 %v34
    %v149 = vunpack.c.l.b16 %v35
    %v150 = vunpack.c.h.b16 %v35
    %v151 = vunpack.c.l.b16 %v36
    %v152 = vunpack.c.h.b16 %v36
    %v153 = vunpack.c.l.b16 %v37
    %v154 = vpack.c.b16 %v147, %v147
    %v155 = vpack.c.b16 %v148, %v148
    %v156 = vpack.c.b16 %v149, %v149
    %v157 = vpack.c.b16 %v150, %v150
    %v158 = vpack.c.b16 %v151, %v151
    %v159 = vpack.c.b16 %v152, %v152
    %v160 = vpack.c.b16 %v153, %v153
    %v265 = vunpack.c.l.b16 %v38
    %v266 = vunpack.c.l.b16 %v39
    %v267 = vunpack.c.l.b16 %v40
    %v268 = vunpack.c.l.b16 %v41
    %v269 = vunpack.c.l.b16 %v42
    %v270 = vunpack.c.l.b16 %v43
    %v271 = vunpack.c.l.b16 %v44
    %v272 = vunpack.c.l.b16 %v45
    %v273 = vunpack.c.l.b16 %v46
    %v274 = vunpack.c.l.b16 %v47
    %v275 = vunpack.c.l.b16 %v48
    %v276 = vunpack.c.l.b16 %v49
    %v277 = vunpack.c.l.b16 %v50
    %v278 = vunpack.c.l.b16 %v51
    %v279 = vunpack.c.l.b16 %v52
    %v280 = vunpack.c.l.b16 %v53
    %v281 = vunpack.c.l.b16 %v54
    %v282 = vunpack.c.l.b16 %v55
    %v283 = vunpack.c.l.b16 %v56
    %v284 = vunpack.c.l.b16 %v57
    %v285 = vunpack.c.l.b16 %v58
    %v286 = vunpack.c.l.b16 %v59
    %v287 = vunpack.c.l.b16 %v60
    %v288 = vunpack.c.l.b16 %v61
    %v289 = vunpack.c.l.b16 %v62
    %v290 = vunpack.c.l.b16 %v63
    %v291 = vunpack.c.l.b16 %v64
    %v292 = vunpack.c.l.b16 %v65
    %v293 = vunpack.c.l.b16 %v66
    %v294 = vunpack.c.l.b16 %v67
    %v295 = vunpack.c.l.b16 %v68
    %v296 = vunpack.c.l.b16 %v69
    %v297 = vunpack.c.l.b16 %v70
    %v298 = vunpack.c.l.b16 %v71
    %v299 = vunpack.c.l.b16 %v72
    %v300 = vunpack.c.l.b16 %v73
    %v301 = vunpack.c.l.b16 %v74
    %v302 = vunpack.c.l.b16 %v75
    %v303 = vunpack.c.l.b16 %v76
    %v304 = vunpack.c.l.b16 %v77
    %v305 = vunpack.c.l.b16 %v78
    %v306 = vunpack.c.l.b16 %v79
    %v307 = vunpack.c.l.b16 %v80
    %v308 = vunpack.c.l.b16 %v81
    %v309 = vunpack.c.l.b16 %v82
    %v310 = vunpack.c.l.b16 %v83
    %v311 = vunpack.c.l.b16 %v84
    %v312 = vunpack.c.l.b16 %v85
    %v313 = vunpack.c.l.b16 %v86
    %v314 = vunpack.c.l.b16 %v87
    %v315 = vunpack.c.l.b16 %v88
    %v316 = vunpack.c.l.b16 %v89
    %v317 = vunpack.c.l.b16 %v90
    %v318 = vunpack.c.l.b16 %v91
    %v319 = vunpack.c.l.b16 %v92
    %v320 = vunpack.c.l.b16 %v93
    %v321 = vunpack.c.l.b16 %v94
    %v322 = vunpack.c.l.b16 %v95
    %v323 = vunpack.c.l.b16 %v96
    %v324 = vunpack.c.l.b16 %v97
    %v325 = vunpack.c.l.b16 %v98
    %v326 = vunpack.c.l.b16 %v99
    %v327 = vunpack.c.l.b16 %v100
    %v328 = vunpack.c.l.b16 %v101
    %v329 = vunpack.c.l.b16 %v102
    %v330 = vunpack.c.l.b16 %v103
    %v331 = vunpack.c.l.b16 %v104
    %v332 = vunpack.c.l.b16 %v105
    %v333 = vunpack.c.l.b16 %v106
    %v334 = vunpack.c.l.b16 %v107
    %v335 = vunpack.c.l.b16 %v108
    %v336 = vunpack.c.l.b16 %v109
    %v337 = vunpack.c.l.b16 %v110
    %v338 = vunpack.c.l.b16 %v111
    %v339 = vunpack.c.l.b16 %v112
    %v340 = vunpack.c.l.b16 %v113
    %v341 = vunpack.c.l.b16 %v114
    %v342 = vunpack.c.l.b16 %v115
    %v343 = vunpack.c.l.b16 %v116
    %v344 = vunpack.c.l.b16 %v117
    %v345 = vunpack.c.l.b16 %v118
    %v346 = vunpack.c.l.b16 %v119
    %v347 = vunpack.c.l.b16 %v120
    %v348 = vunpack.c.l.b16 %v121
    %v349 = vunpack.c.l.b16 %v122
    %v350 = vunpack.c.l.b16 %v123
    %v351 = vunpack.c.l.b16 %v124
    %v352 = vunpack.c.l.b16 %v125
    %v353 = vunpack.c.l.b16 %v126
    %v354 = vunpack.c.l.b16 %v127
    %v355 = vunpack.c.l.b16 %v128
    %v356 = vunpack.c.l.b16 %v129
    %v357 = vunpack.c.l.b16 %v130
    %v358 = vunpack.c.l.b16 %v131
    %v359 = vunpack.c.l.b16 %v132
    %v360 = vunpack.c.l.b16 %v133
    %v361 = vunpack.c.l.b16 %v134
    %v362 = vunpack.c.l.b16 %v135
    %v363 = vpack.c.b16 %v266, %v265
    %v364 = vpack.c.b16 %v268, %v267
    %v365 = vpack.c.b16 %v270, %v269
    %v366 = vpack.c.b16 %v272, %v271
    %v367 = vpack.c.b16 %v274, %v273
    %v368 = vpack.c.b16 %v276, %v275
    %v369 = vpack.c.b16 %v278, %v277
    %v370 = vpack.c.b16 %v280, %v279
    %v371 = vpack.c.b16 %v282, %v281
    %v372 = vpack.c.b16 %v284, %v283
    %v373 = vpack.c.b16 %v286, %v285
    %v374 = vpack.c.b16 %v288, %v287
    %v375 = vpack.c.b16 %v290, %v289
    %v376 = vpack.c.b16 %v292, %v291
    %v377 = vpack.c.b16 %v294, %v293
    %v378 = vpack.c.b16 %v296, %v295
    %v379 = vpack.c.b16 %v298, %v297
    %v380 = vpack.c.b16 %v300, %v299
    %v381 = vpack.c.b16 %v302, %v301
    %v382 = vpack.c.b16 %v304, %v303
    %v383 = vpack.c.b16 %v306, %v305
    %v384 = vpack.c.b16 %v308, %v307
    %v385 = vpack.c.b16 %v310, %v309
    %v386 = vpack.c.b16 %v312, %v311
    %v387 = vpack.c.b16 %v314, %v313
    %v388 = vpack.c.b16 %v316, %v315
    %v389 = vpack.c.b16 %v318, %v317
    %v390 = vpack.c.b16 %v320, %v319
    %v391 = vpack.c.b16 %v322, %v321
    %v392 = vpack.c.b16 %v324, %v323
    %v393 = vpack.c.b16 %v326, %v325
    %v394 = vpack.c.b16 %v328, %v327
    %v395 = vpack.c.b16 %v330, %v329
    %v396 = vpack.c.b16 %v332, %v331
    %v397 = vpack.c.b16 %v334, %v333
    %v398 = vpack.c.b16 %v336, %v335
    %v399 = vpack.c.b16 %v338, %v337
    %v400 = vpack.c.b16 %v340, %v339
    %v401 = vpack.c.b16 %v342, %v341
    %v402 = vpack.c.b16 %v344, %v343
    %v403 = vpack.c.b16 %v346, %v345
    %v404 = vpack.c.b16 %v348, %v347
    %v405 = vpack.c.b16 %v350, %v349
    %v406 = vpack.c.b16 %v352, %v351
    %v407 = vpack.c.b16 %v354, %v353
    %v408 = vpack.c.b16 %v356, %v355
    %v409 = vpack.c.b16 %v358, %v357
    %v410 = vpack.c.b16 %v360, %v359
    %v411 = vpack.c.b16 %v362, %v361
    %vm461 = vcmask 130048
    %v463 = vsel %vm461, %v160, 0
    %465 = vmatprep.subr.bf16.mxu0 0
    %466 = vmatpush1.bf16.msra.mxu0 %v370
    %467 = vmatprep.subr.bf16.mxu0 0
    %468 = vmatpush1.bf16.msra.mxu0 %v369
    %469 = vmatprep.subr.bf16.mxu0 0
    %470 = vmatpush1.bf16.msra.mxu0 %v368
    %471 = vmatprep.subr.bf16.mxu0 0
    %472 = vmatpush1.bf16.msra.mxu0 %v367
    %473 = vmatprep.subr.bf16.mxu0 0
    %474 = vmatpush1.bf16.msra.mxu0 %v366
    %475 = vmatprep.subr.bf16.mxu0 0
    %476 = vmatpush1.bf16.msra.mxu0 %v365
    %477 = vmatprep.subr.bf16.mxu0 0
    %478 = vmatpush1.bf16.msra.mxu0 %v364
    %479 = vmatprep.subr.bf16.mxu0 0
    %480 = vmatpush1.bf16.msra.mxu0 %v363
    %481 = vmatprep.subr.bf16.mxu0 0
    %482 = vmatpush2.bf16.msra.mxu0 %v378
    %483 = vmatprep.subr.bf16.mxu0 0
    %484 = vmatpush2.bf16.msra.mxu0 %v377
    %485 = vmatprep.subr.bf16.mxu0 0
    %486 = vmatpush2.bf16.msra.mxu0 %v376
    %487 = vmatprep.subr.bf16.mxu0 0
    %488 = vmatpush2.bf16.msra.mxu0 %v375
    %489 = vmatprep.subr.bf16.mxu0 0
    %490 = vmatpush2.bf16.msra.mxu0 %v374
    %491 = vmatprep.subr.bf16.mxu0 0
    %492 = vmatpush2.bf16.msra.mxu0 %v373
    %493 = vmatprep.subr.bf16.mxu0 0
    %494 = vmatpush2.bf16.msra.mxu0 %v372
    %495 = vmatprep.subr.bf16.mxu0 0
    %496 = vmatpush2.bf16.msra.mxu0 %v371
    %497 = vmatprep.mubr.bf16.mxu0 %v155
    %498 = vmatmul.mubr.bf16.gmra.mxu0 %v154
    %v499 = vpop.f32.mrf.mxu0
    %v500 = vadd.f32 %v141, %v499
    %v501 = vpop.f32.mrf.mxu0
    %v502 = vpop.f32.mrf.mxu0
    %v503 = vpop.f32.mrf.mxu0
    %504 = vdwg.mxu0
    %505 = vmatprep.subr.bf16.mxu0 0
    %506 = vmatpush1.bf16.msra.mxu0 %v386
    %507 = vmatprep.subr.bf16.mxu0 0
    %508 = vmatpush1.bf16.msra.mxu0 %v385
    %509 = vmatprep.subr.bf16.mxu0 0
    %510 = vmatpush1.bf16.msra.mxu0 %v384
    %511 = vmatprep.subr.bf16.mxu0 0
    %512 = vmatpush1.bf16.msra.mxu0 %v383
    %513 = vmatprep.subr.bf16.mxu0 0
    %514 = vmatpush1.bf16.msra.mxu0 %v382
    %515 = vmatprep.subr.bf16.mxu0 0
    %516 = vmatpush1.bf16.msra.mxu0 %v381
    %517 = vmatprep.subr.bf16.mxu0 0
    %518 = vmatpush1.bf16.msra.mxu0 %v380
    %519 = vmatprep.subr.bf16.mxu0 0
    %520 = vmatpush1.bf16.msra.mxu0 %v379
    %521 = vmatprep.subr.bf16.mxu0 0
    %522 = vmatpush2.bf16.msra.mxu0 %v394
    %523 = vmatprep.subr.bf16.mxu0 0
    %524 = vmatpush2.bf16.msra.mxu0 %v393
    %525 = vmatprep.subr.bf16.mxu0 0
    %526 = vmatpush2.bf16.msra.mxu0 %v392
    %527 = vmatprep.subr.bf16.mxu0 0
    %528 = vmatpush2.bf16.msra.mxu0 %v391
    %529 = vmatprep.subr.bf16.mxu0 0
    %530 = vmatpush2.bf16.msra.mxu0 %v390
    %531 = vmatprep.subr.bf16.mxu0 0
    %532 = vmatpush2.bf16.msra.mxu0 %v389
    %533 = vmatprep.subr.bf16.mxu0 0
    %534 = vmatpush2.bf16.msra.mxu0 %v388
    %535 = vmatprep.subr.bf16.mxu0 0
    %536 = vmatpush2.bf16.msra.mxu0 %v387
    %537 = vmatprep.mubr.bf16.mxu0 %v157
    %538 = vmatmul.mubr.bf16.gmra.mxu0 %v156
    %v539 = vpop.f32.mrf.mxu0
    %v540 = vadd.f32 %v500, %v539
    %v541 = vpop.f32.mrf.mxu0
    %v542 = vpop.f32.mrf.mxu0
    %v543 = vpop.f32.mrf.mxu0
    %544 = vdwg.mxu0
    %545 = vmatprep.subr.bf16.mxu0 0
    %546 = vmatpush1.bf16.msra.mxu0 %v402
    %547 = vmatprep.subr.bf16.mxu0 0
    %548 = vmatpush1.bf16.msra.mxu0 %v401
    %549 = vmatprep.subr.bf16.mxu0 0
    %550 = vmatpush1.bf16.msra.mxu0 %v400
    %551 = vmatprep.subr.bf16.mxu0 0
    %552 = vmatpush1.bf16.msra.mxu0 %v399
    %553 = vmatprep.subr.bf16.mxu0 0
    %554 = vmatpush1.bf16.msra.mxu0 %v398
    %555 = vmatprep.subr.bf16.mxu0 0
    %556 = vmatpush1.bf16.msra.mxu0 %v397
    %557 = vmatprep.subr.bf16.mxu0 0
    %558 = vmatpush1.bf16.msra.mxu0 %v396
    %559 = vmatprep.subr.bf16.mxu0 0
    %560 = vmatpush1.bf16.msra.mxu0 %v395
    %561 = vmatprep.subr.bf16.mxu0 0
    %562 = vmatpush2.bf16.msra.mxu0 %v410
    %563 = vmatprep.subr.bf16.mxu0 0
    %564 = vmatpush2.bf16.msra.mxu0 %v409
    %565 = vmatprep.subr.bf16.mxu0 0
    %566 = vmatpush2.bf16.msra.mxu0 %v408
    %567 = vmatprep.subr.bf16.mxu0 0
    %568 = vmatpush2.bf16.msra.mxu0 %v407
    %569 = vmatprep.subr.bf16.mxu0 0
    %570 = vmatpush2.bf16.msra.mxu0 %v406
    %571 = vmatprep.subr.bf16.mxu0 0
    %572 = vmatpush2.bf16.msra.mxu0 %v405
    %573 = vmatprep.subr.bf16.mxu0 0
    %574 = vmatpush2.bf16.msra.mxu0 %v404
    %575 = vmatprep.subr.bf16.mxu0 0
    %576 = vmatpush2.bf16.msra.mxu0 %v403
    %577 = vmatprep.mubr.bf16.mxu0 %v159
    %578 = vmatmul.mubr.bf16.gmra.mxu0 %v158
    %v579 = vpop.f32.mrf.mxu0
    %v580 = vadd.f32 %v540, %v579
    %v581 = vpop.f32.mrf.mxu0
    %v582 = vpop.f32.mrf.mxu0
    %v583 = vpop.f32.mrf.mxu0
    %584 = vdwg.mxu0
    %585 = vmatprep.subr.bf16.mxu0 0
    %586 = vmatpush1.bf16.msra.mxu0 0
    %587 = vmatprep.subr.bf16.mxu0 0
    %588 = vmatpush1.bf16.msra.mxu0 0
    %589 = vmatprep.subr.bf16.mxu0 0
    %590 = vmatpush1.bf16.msra.mxu0 0
    %591 = vmatprep.subr.bf16.mxu0 0
    %592 = vmatpush1.bf16.msra.mxu0 0
    %593 = vmatprep.subr.bf16.mxu0 0
    %594 = vmatpush1.bf16.msra.mxu0 0
    %595 = vmatprep.subr.bf16.mxu0 0
    %596 = vmatpush1.bf16.msra.mxu0 0
    %597 = vmatprep.subr.bf16.mxu0 0
    %598 = vmatpush1.bf16.msra.mxu0 0
    %599 = vmatprep.subr.bf16.mxu0 0
    %600 = vmatpush1.bf16.msra.mxu0 %v411
    %601 = vmatprep.subr.bf16.mxu0 0
    %602 = vmatpush2.bf16.msra.mxu0 0
    %603 = vmatprep.subr.bf16.mxu0 0
    %604 = vmatpush2.bf16.msra.mxu0 0
    %605 = vmatprep.subr.bf16.mxu0 0
    %606 = vmatpush2.bf16.msra.mxu0 0
    %607 = vmatprep.subr.bf16.mxu0 0
    %608 = vmatpush2.bf16.msra.mxu0 0
    %609 = vmatprep.subr.bf16.mxu0 0
    %610 = vmatpush2.bf16.msra.mxu0 0
    %611 = vmatprep.subr.bf16.mxu0 0
    %612 = vmatpush2.bf16.msra.mxu0 0
    %613 = vmatprep.subr.bf16.mxu0 0
    %614 = vmatpush2.bf16.msra.mxu0 0
    %615 = vmatprep.subr.bf16.mxu0 0
    %616 = vmatpush2.bf16.msra.mxu0 0
    %617 = vmatprep.mubr.bf16.mxu0 0
    %618 = vmatmul.mubr.bf16.gmra.mxu0 %v463
    %v619 = vpop.f32.mrf.mxu0
    %v620 = vadd.f32 %v580, %v619
    %v621 = vpop.f32.mrf.mxu0
    %v622 = vpop.f32.mrf.mxu0
    %v623 = vpop.f32.mrf.mxu0
    %624 = vdwg.mxu0
    %v625 = vmax.f32 %v620, 0.0
    %v626 = vpack.c.bf16 %v625, %v625
    %v627 = vld [vmem:[%s3] sm:$0xf]
    %v628 = vld [vmem:[%s3 + $0x4] sm:$0xf]
    %v629 = vld [vmem:[%s3 + $0x8] sm:$0xf]
    %v630 = vld [vmem:[%s3 + $0xc] sm:$0x3]
    %v631 = vld [vmem:[%s4] sm:$0x1]
    %v633 = vlaneseq
    %v634 = vshrl.u32 %v633, 7
    %v635 = vsub.s32 0, %v634
    %v636 = vrot.slane %v631, %v635
    %v642 = vunpack.c.l.b16 %v627
    %v643 = vunpack.c.l.b16 %v628
    %v644 = vunpack.c.l.b16 %v629
    %v645 = vunpack.c.l.b16 %v630
    %v646 = vpack.c.b16 %v643, %v642
    %v647 = vpack.c.b16 %v645, %v644
    %vm649 = vcmask 228352
    %v651 = vsel %vm649, %v626, 0
    %vm653 = vcmask 1045504
    %v655 = vsel %vm653, %v647, 0
    %657 = vmatprep.subr.bf16.mxu0 0
    %658 = vmatpush1.bf16.msra.mxu0 0
    %659 = vmatprep.subr.bf16.mxu0 0
    %660 = vmatpush1.bf16.msra.mxu0 0
    %661 = vmatprep.subr.bf16.mxu0 0
    %662 = vmatpush1.bf16.msra.mxu0 0
    %663 = vmatprep.subr.bf16.mxu0 0
    %664 = vmatpush1.bf16.msra.mxu0 0
    %665 = vmatprep.subr.bf16.mxu0 0
    %666 = vmatpush1.bf16.msra.mxu0 0
    %667 = vmatprep.subr.bf16.mxu0 0
    %668 = vmatpush1.bf16.msra.mxu0 0
    %669 = vmatprep.subr.bf16.mxu0 0
    %670 = vmatpush1.bf16.msra.mxu0 %v655
    %671 = vmatprep.subr.bf16.mxu0 0
    %672 = vmatpush1.bf16.msra.mxu0 %v646
    %673 = vmatprep.subr.bf16.mxu0 0
    %674 = vmatpush2.bf16.msra.mxu0 0
    %675 = vmatprep.subr.bf16.mxu0 0
    %676 = vmatpush2.bf16.msra.mxu0 0
    %677 = vmatprep.subr.bf16.mxu0 0
    %678 = vmatpush2.bf16.msra.mxu0 0
    %679 = vmatprep.subr.bf16.mxu0 0
    %680 = vmatpush2.bf16.msra.mxu0 0
    %681 = vmatprep.subr.bf16.mxu0 0
    %682 = vmatpush2.bf16.msra.mxu0 0
    %683 = vmatprep.subr.bf16.mxu0 0
    %684 = vmatpush2.bf16.msra.mxu0 0
    %685 = vmatprep.subr.bf16.mxu0 0
    %686 = vmatpush2.bf16.msra.mxu0 0
    %687 = vmatprep.subr.bf16.mxu0 0
    %688 = vmatpush2.bf16.msra.mxu0 0
    %689 = vmatprep.mubr.bf16.mxu0 0
    %690 = vmatmul.mubr.bf16.gmra.mxu0 %v651
    %v691 = vpop.f32.mrf.mxu0
    %v692 = vadd.f32 %v636, %v691
    %v693 = vpop.f32.mrf.mxu0
    %v694 = vpop.f32.mrf.mxu0
    %v695 = vpop.f32.mrf.mxu0
    %696 = vdwg.mxu0
    %v697 = vmax.f32 %v692, 0.0
    %v698 = vpack.c.bf16 %v697, %v697
    %v699 = vld [vmem:[%s5] sm:$0xf]
    %v700 = vld [vmem:[%s5 + $0x4] sm:$0xf]
    %v701 = vld [vmem:[%s5 + $0x8] sm:$0xf]
    %v702 = vld [vmem:[%s5 + $0xc] sm:$0x3]
    %v703 = vld [vmem:[%s6] sm:$0x1]
    %v705 = vlaneseq
    %v706 = vshrl.u32 %v705, 7
    %v707 = vsub.s32 0, %v706
    %v708 = vrot.slane %v703, %v707
    %v714 = vunpack.c.l.b16 %v699
    %v715 = vunpack.c.l.b16 %v700
    %v716 = vunpack.c.l.b16 %v701
    %v717 = vunpack.c.l.b16 %v702
    %v718 = vpack.c.b16 %v715, %v714
    %v719 = vpack.c.b16 %v717, %v716
    %v722 = vsel %vm649, %v698, 0
    %v725 = vsel %vm653, %v719, 0
    %727 = vmatprep.subr.bf16.mxu0 0
    %728 = vmatpush1.bf16.msra.mxu0 0
    %729 = vmatprep.subr.bf16.mxu0 0
    %730 = vmatpush1.bf16.msra.mxu0 0
    %731 = vmatprep.subr.bf16.mxu0 0
    %732 = vmatpush1.bf16.msra.mxu0 0
    %733 = vmatprep.subr.bf16.mxu0 0
    %734 = vmatpush1.bf16.msra.mxu0 0
    %735 = vmatprep.subr.bf16.mxu0 0
    %736 = vmatpush1.bf16.msra.mxu0 0
    %737 = vmatprep.subr.bf16.mxu0 0
    %738 = vmatpush1.bf16.msra.mxu0 0
    %739 = vmatprep.subr.bf16.mxu0 0
    %740 = vmatpush1.bf16.msra.mxu0 %v725
    %741 = vmatprep.subr.bf16.mxu0 0
    %742 = vmatpush1.bf16.msra.mxu0 %v718
    %743 = vmatprep.subr.bf16.mxu0 0
    %744 = vmatpush2.bf16.msra.mxu0 0
    %745 = vmatprep.subr.bf16.mxu0 0
    %746 = vmatpush2.bf16.msra.mxu0 0
    %747 = vmatprep.subr.bf16.mxu0 0
    %748 = vmatpush2.bf16.msra.mxu0 0
    %749 = vmatprep.subr.bf16.mxu0 0
    %750 = vmatpush2.bf16.msra.mxu0 0
    %751 = vmatprep.subr.bf16.mxu0 0
    %752 = vmatpush2.bf16.msra.mxu0 0
    %753 = vmatprep.subr.bf16.mxu0 0
    %754 = vmatpush2.bf16.msra.mxu0 0
    %755 = vmatprep.subr.bf16.mxu0 0
    %756 = vmatpush2.bf16.msra.mxu0 0
    %757 = vmatprep.subr.bf16.mxu0 0
    %758 = vmatpush2.bf16.msra.mxu0 0
    %759 = vmatprep.mubr.bf16.mxu0 0
    %760 = vmatmul.mubr.bf16.gmra.mxu0 %v722
    %v761 = vpop.f32.mrf.mxu0
    %v762 = vadd.f32 %v708, %v761
    %v763 = vpop.f32.mrf.mxu0
    %v764 = vpop.f32.mrf.mxu0
    %v765 = vpop.f32.mrf.mxu0
    %766 = vdwg.mxu0
    %v767 = vmax.f32 %v762, 0.0
    %v768 = vpack.c.bf16 %v767, %v767
    %v769 = vld [vmem:[%s7] sm:$0xf]
    %v770 = vld [vmem:[%s7 + $0x4] sm:$0xf]
    %v771 = vld [vmem:[%s7 + $0x8] sm:$0xf]
    %v772 = vld [vmem:[%s7 + $0xc] sm:$0x3]
    %v773 = vld [vmem:[%s8] sm:$0x1]
    %v775 = vlaneseq
    %v776 = vshrl.u32 %v775, 7
    %v777 = vsub.s32 0, %v776
    %v778 = vrot.slane %v773, %v777
    %v784 = vunpack.c.l.b16 %v769
    %v785 = vunpack.c.l.b16 %v770
    %v786 = vunpack.c.l.b16 %v771
    %v787 = vunpack.c.l.b16 %v772
    %v788 = vpack.c.b16 %v785, %v784
    %v789 = vpack.c.b16 %v787, %v786
    %v792 = vsel %vm649, %v768, 0
    %v795 = vsel %vm653, %v789, 0
    %797 = vmatprep.subr.bf16.mxu0 0
    %798 = vmatpush1.bf16.msra.mxu0 0
    %799 = vmatprep.subr.bf16.mxu0 0
    %800 = vmatpush1.bf16.msra.mxu0 0
    %801 = vmatprep.subr.bf16.mxu0 0
    %802 = vmatpush1.bf16.msra.mxu0 0
    %803 = vmatprep.subr.bf16.mxu0 0
    %804 = vmatpush1.bf16.msra.mxu0 0
    %805 = vmatprep.subr.bf16.mxu0 0
    %806 = vmatpush1.bf16.msra.mxu0 0
    %807 = vmatprep.subr.bf16.mxu0 0
    %808 = vmatpush1.bf16.msra.mxu0 0
    %809 = vmatprep.subr.bf16.mxu0 0
    %810 = vmatpush1.bf16.msra.mxu0 %v795
    %811 = vmatprep.subr.bf16.mxu0 0
    %812 = vmatpush1.bf16.msra.mxu0 %v788
    %813 = vmatprep.subr.bf16.mxu0 0
    %814 = vmatpush2.bf16.msra.mxu0 0
    %815 = vmatprep.subr.bf16.mxu0 0
    %816 = vmatpush2.bf16.msra.mxu0 0
    %817 = vmatprep.subr.bf16.mxu0 0
    %818 = vmatpush2.bf16.msra.mxu0 0
    %819 = vmatprep.subr.bf16.mxu0 0
    %820 = vmatpush2.bf16.msra.mxu0 0
    %821 = vmatprep.subr.bf16.mxu0 0
    %822 = vmatpush2.bf16.msra.mxu0 0
    %823 = vmatprep.subr.bf16.mxu0 0
    %824 = vmatpush2.bf16.msra.mxu0 0
    %825 = vmatprep.subr.bf16.mxu0 0
    %826 = vmatpush2.bf16.msra.mxu0 0
    %827 = vmatprep.subr.bf16.mxu0 0
    %828 = vmatpush2.bf16.msra.mxu0 0
    %829 = vmatprep.mubr.bf16.mxu0 0
    %830 = vmatmul.mubr.bf16.gmra.mxu0 %v792
    %v831 = vpop.f32.mrf.mxu0
    %v832 = vadd.f32 %v778, %v831
    %v833 = vpop.f32.mrf.mxu0
    %v834 = vpop.f32.mrf.mxu0
    %v835 = vpop.f32.mrf.mxu0
    %836 = vdwg.mxu0
    %vm837 = vcmask 80896
    %v838 = vsel %vm837, %v832, -inf
    %839 = vmax.xlane.f32.xlu0 %v838
    %v840 = vpop.xlane.xlu0 %839
    %v841 = vsub.f32 %v832, %v840
    %v842 = vmul.f32 %v841, 1.442695
    %v843 = vpow.pop %v842
    %v844 = vsel %vm837, %v843, 0.0
    %845 = vadd.xlane.f32.xlu0 %v844
    %v846 = vpop.xlane.xlu0 %845
    %v847 = vlog2.pop %v846
    %v848 = vmul.f32 %v847, 0.6931472
    %v849 = vsub.f32 %v841, %v848
    %850 = vst.msk [vmem:[#allocation2] sm:$0xff] %vm837, %v849
    // Predicated region
    $region38: #{tpu_custom_call.1} parent=1 // pred_check
      _
    $region39: #{tpu_custom_call.1} parent=1 // pred_check_branch
      %852 = sbr.rel (0) target = $region41
    $region40: #{tpu_custom_call.1} parent=1 // pred_region
      %s854 = ssub.s32 128, 128
      %855 = vsyncadd [#allocation3], %s854
      %s857 = sshll.u32 [#allocation2], 4
      %s858 = int_to_ptr.vmem [resolvable:$true] %s857
      %860 = dma.vmem_to_hbm [thread:$0]  %s858, 128, %s9, [#allocation3]
    $region41: #{tpu_custom_call.1} parent=1 // pred_fallthru
      _
    // Predicated region
    $region42: #{tpu_custom_call.1} parent=1 // pred_check
      _
    $region43: #{tpu_custom_call.1} parent=1 // pred_check_branch
      %862 = sbr.rel (0) target = $region45
    $region44: #{tpu_custom_call.1} parent=1 // pred_region
      %863 = dma.done [#allocation3], 128
    $region45: #{tpu_custom_call.1} parent=1 // pred_fallthru
      _
    %864 = vsyncpa [#allocation3], 1

</llo_original>
